<compile_context>
chip_gen: v7x
topology: tpu7x:2x2x1
jax: 0.10.0
libtpu: 0.0.40
codegen_flags: <defaults>
</compile_context>

<pallas_src>
import functools

import jax
import jax.numpy as jnp
from jax.experimental import pallas as pl
from jax.experimental.pallas import tpu as pltpu


# --------------------------------------------------------------------------
# kernels
# --------------------------------------------------------------------------
def _time_mask_kernel(start_ref, stop_ref, x_ref, o_ref, *, n_max):
    """dim=1 (time masking) on the flattened [batch_block, time*fea] layout.

    start/stop are flat-index bounds (pos*F, (pos+len)*F) so no div/mod is
    needed in the kernel; the compare/select runs lane-dense and stores are
    full-width vst.
    """
    blk_b, blk_tf = x_ref.shape
    idx = jax.lax.broadcasted_iota(jnp.int32, (blk_b, blk_tf), 1)
    x = x_ref[...]
    mask = None
    for m in range(n_max):  # n_max == drop_count_high (small, static unroll)
        start = start_ref[:, m : m + 1]  # [blk_b, 1] int32
        stop = stop_ref[:, m : m + 1]
        hit = (start <= idx) & (idx < stop)
        mask = hit if mask is None else (mask | hit)
    o_ref[...] = jnp.where(mask, jnp.zeros_like(x), x)


def _freq_mask_kernel(fea_idx_ref, start_ref, stop_ref, x_ref, o_ref, *, n_max):
    """dim=2 (frequency masking) on the flattened [batch_block, time*fea] layout.

    fea_idx_ref is a [1, time*fea] int32 row holding the feature index of each
    flat column (0..F-1 repeated T times); it is broadcast across the batch
    block.  Keeps the store lane-dense instead of F(=40)/128 masked stores.
    """
    x = x_ref[...]
    idx = fea_idx_ref[...]  # [1, blk_tf]
    mask = None
    for m in range(n_max):
        start = start_ref[:, m : m + 1]  # [blk_b, 1]
        stop = stop_ref[:, m : m + 1]
        hit = (start <= idx) & (idx < stop)  # broadcasts -> [blk_b, blk_tf]
        mask = hit if mask is None else (mask | hit)
    o_ref[...] = jnp.where(mask, jnp.zeros_like(x), x)


# --------------------------------------------------------------------------
# wrapper
# --------------------------------------------------------------------------
def _choose_batch_block(batch, row_bytes, target_bytes):
    """Batch block size: either the full batch, or a multiple of 8 rows.

    Keeps blocks ~target_bytes (double-buffered in+out stays far below the
    scoped-VMEM default on v5e/v6e/v7x) and prefers a block that divides the
    batch exactly to avoid padding copies.
    """
    rows = max(1, target_bytes // max(row_bytes, 1))
    if rows >= batch:
        return batch, batch  # single block covers everything
    rows = max(8, (rows // 8) * 8)  # sublane-aligned for the (8,128) tiling
    for cand in range(rows, 7, -8):  # try to divide the batch exactly
        if batch % cand == 0:
            return cand, batch
    padded = -(-batch // rows) * rows
    return rows, padded


def spectrogram_drop(
    spectrogram,
    key,
    *,
    drop_length_low: int = 5,
    drop_length_high: int = 15,
    drop_count_low: int = 1,
    drop_count_high: int = 3,
    replace: str = "zeros",
    dim: int = 1,
    block_bytes: int = 2 * 1024 * 1024,
):
    """JAX/Pallas equivalent of SpectrogramDrop.forward (replace='zeros').

    Returns (augmented, mask_pos, mask_len); mask_len is zero for masks beyond
    the sampled n_masks, so the pair fully describes the applied augmentation.
    """
    if replace != "zeros":
        raise NotImplementedError("only replace='zeros' is implemented")
    assert dim in (1, 2)

    # 4-D input -> collapse leading two dims (matches torch .view(-1, s2, s3));
    # like the PyTorch forward, the collapsed 3-D shape is returned.
    if spectrogram.ndim == 4:
        spectrogram = spectrogram.reshape(
            -1, spectrogram.shape[2], spectrogram.shape[3]
        )

    B, T, F = spectrogram.shape
    D = T if dim == 1 else F
    n_max = drop_count_high

    k_n, k_len, k_pos = jax.random.split(key, 3)

    if n_max == 0:  # drop_count_high == 0 -> never any mask
        return (
            spectrogram,
            jnp.zeros((B, 0), jnp.int32),
            jnp.zeros((B, 0), jnp.int32),
        )

    # n_masks ~ randint[drop_count_low, drop_count_high] (device scalar; no
    # host sync / per-value recompiles).  Unused masks get length 0 (empty
    # interval -> no-op) so the kernel is always compiled for n_max masks.
    n_masks = jax.random.randint(
        k_n, (), drop_count_low, drop_count_high + 1, dtype=jnp.int32
    )
    mask_len = jax.random.randint(
        k_len, (B, n_max), drop_length_low, drop_length_high, dtype=jnp.int32
    )
    active = jnp.arange(n_max, dtype=jnp.int32) < n_masks
    mask_len = jnp.where(active[None, :], mask_len, 0)
    mask_pos = jax.random.randint(
        k_pos, (B, n_max), 0, max(1, D), dtype=jnp.int32
    )

    # Per-batch mask bounds, both dims operate on the lane-dense [B, T*F]
    # layout.  dim=1 uses flat-index bounds; dim=2 keeps feature-index bounds
    # and compares against a precomputed feature-index row.
    if dim == 1:
        start = (mask_pos * F).astype(jnp.int32)
        stop = ((mask_pos + mask_len) * F).astype(jnp.int32)
    else:
        start = mask_pos
        stop = mask_pos + mask_len
    x = spectrogram.reshape(B, T * F)

    itemsize = jnp.dtype(spectrogram.dtype).itemsize
    row_bytes = T * F * itemsize
    b_blk, b_pad = _choose_batch_block(B, row_bytes, block_bytes)

    if b_pad != B:  # pad batch so the grid tiles exactly; padded rows are no-ops
        pad = b_pad - B
        x = jnp.pad(x, ((0, pad), (0, 0)))
        start = jnp.pad(start, ((0, pad), (0, 0)))
        stop = jnp.pad(stop, ((0, pad), (0, 0)))

    grid = (b_pad // b_blk,)
    bound_spec = pl.BlockSpec((b_blk, n_max), lambda i: (i, 0))
    x_spec = pl.BlockSpec((b_blk, T * F), lambda i: (i, 0))

    if dim == 1:
        kernel = functools.partial(_time_mask_kernel, n_max=n_max)
        in_specs = [bound_spec, bound_spec, x_spec]
        args = (start, stop, x)
    else:
        fea_idx = jnp.tile(jnp.arange(F, dtype=jnp.int32), T).reshape(1, T * F)
        idx_spec = pl.BlockSpec((1, T * F), lambda i: (0, 0))  # same block every step
        kernel = functools.partial(_freq_mask_kernel, n_max=n_max)
        in_specs = [idx_spec, bound_spec, bound_spec, x_spec]
        args = (fea_idx, start, stop, x)

    out = pl.pallas_call(
        kernel,
        out_shape=jax.ShapeDtypeStruct(x.shape, x.dtype),
        grid=grid,
        in_specs=in_specs,
        out_specs=x_spec,
        compiler_params=pltpu.CompilerParams(
            dimension_semantics=("parallel",)  # v7x: batch blocks split across 2 TCs
        ),
    )(*args)

    if b_pad != B:
        out = out[:B]
    out = out.reshape(B, T, F)
    return out, mask_pos, mask_len


# --------------------------------------------------------------------------
# pure-JAX reference (mirrors the PyTorch mask construction)
# --------------------------------------------------------------------------
def _reference(spectrogram, mask_pos, mask_len, dim):
    B, T, F = spectrogram.shape
    D = T if dim == 1 else F
    arange = jnp.arange(D).reshape(1, 1, -1)          # [1, 1, D]
    mp = mask_pos[:, :, None]                          # [B, n, 1]
    ml = mask_len[:, :, None]                          # [B, n, 1]
    mask = (mp <= arange) & (arange < mp + ml)         # [B, n, D]
    mask = jnp.any(mask, axis=1)                       # [B, D]
    mask = mask[:, :, None] if dim == 1 else mask[:, None, :]
    return jnp.where(mask, 0.0, spectrogram)


if __name__ == "__main__":
    key = jax.random.PRNGKey(0)
    k_data, k_aug = jax.random.split(key)

    # [batch, time, fea] — matches the module's doctest shapes.
    B, T, F = 4, 150, 40
    spectrogram = jax.random.uniform(k_data, (B, T, F), dtype=jnp.float32)

    # time masking (dim=1, flattened lane-dense path)
    out, mask_pos, mask_len = spectrogram_drop(spectrogram, k_aug, dim=1)
    out = jax.block_until_ready(out)
    assert out.shape == spectrogram.shape
    ref = _reference(spectrogram, mask_pos, mask_len, dim=1)
    assert jnp.allclose(out, ref), "Pallas kernel mismatch vs reference (dim=1)"

    # frequency masking (dim=2, now also flattened lane-dense)
    out2, mp2, ml2 = spectrogram_drop(spectrogram, k_aug, dim=2)
    out2 = jax.block_until_ready(out2)
    ref2 = _reference(spectrogram, mp2, ml2, dim=2)
    assert jnp.allclose(out2, ref2), "Pallas kernel mismatch vs reference (dim=2)"

    # larger batch with a small block budget -> exercises the multi-block grid
    # and batch-padding path for both dims.
    B2, T2, F2 = 20, 256, 40
    spec_big = jax.random.uniform(k_data, (B2, T2, F2), dtype=jnp.float32)
    out3, mp3, ml3 = spectrogram_drop(
        spec_big, jax.random.PRNGKey(7), dim=1, block_bytes=64 * 1024
    )
    out3 = jax.block_until_ready(out3)
    ref3 = _reference(spec_big, mp3, ml3, dim=1)
    assert jnp.allclose(out3, ref3), "Pallas kernel mismatch vs reference (big, dim=1)"

    out4, mp4, ml4 = spectrogram_drop(
        spec_big, jax.random.PRNGKey(11), dim=2, block_bytes=64 * 1024
    )
    out4 = jax.block_until_ready(out4)
    ref4 = _reference(spec_big, mp4, ml4, dim=2)
    assert jnp.allclose(out4, ref4), "Pallas kernel mismatch vs reference (big, dim=2)"

    print("KERNEL_OK")
</pallas_src>

<mosaic_0001>
module attributes {stable_mosaic.version = 11 : i64} {
  func.func @_time_mask_kernel(%arg0: i32, %arg1: memref<4x3xi32, #tpu.memory_space<vmem>>, %arg2: memref<4x3xi32, #tpu.memory_space<vmem>>, %arg3: memref<4x6000xf32, #tpu.memory_space<vmem>>, %arg4: memref<4x6000xf32, #tpu.memory_space<vmem>>) attributes {dimension_semantics = [#tpu.dimension_semantics<parallel>], iteration_bounds = array<i64: 1>, scalar_prefetch = 0 : i64, scratch_operands = 0 : i64, tpu.core_type = #tpu.core_type<tc>, window_params = [{transform_indices = @transform_0, window_bounds = array<i64: 4, 3>}, {transform_indices = @transform_1, window_bounds = array<i64: 4, 3>}, {transform_indices = @transform_2, window_bounds = array<i64: 4, 6000>}, {transform_indices = @transform_3, window_bounds = array<i64: 4, 6000>}]} {
    %0 = tpu.iota {dimensions = array<i32: 1>} : vector<4x6000xi32>
    %c0 = arith.constant 0 : index
    %c0_0 = arith.constant 0 : index
    %1 = vector.load %arg3[%c0, %c0_0] : memref<4x6000xf32, #tpu.memory_space<vmem>>, vector<4x6000xf32>
    %c0_1 = arith.constant 0 : index
    %c0_2 = arith.constant 0 : index
    %2 = vector.load %arg1[%c0_1, %c0_2] : memref<4x3xi32, #tpu.memory_space<vmem>>, vector<4x1xi32>
    %c0_3 = arith.constant 0 : index
    %c0_4 = arith.constant 0 : index
    %3 = vector.load %arg2[%c0_3, %c0_4] : memref<4x3xi32, #tpu.memory_space<vmem>>, vector<4x1xi32>
    %4 = vector.broadcast %2 : vector<4x1xi32> to vector<4x6000xi32>
    %5 = arith.cmpi sle, %4, %0 : vector<4x6000xi32>
    %6 = vector.broadcast %3 : vector<4x1xi32> to vector<4x6000xi32>
    %7 = arith.cmpi slt, %0, %6 : vector<4x6000xi32>
    %8 = arith.andi %5, %7 : vector<4x6000xi1>
    %c0_5 = arith.constant 0 : index
    %c1 = arith.constant 1 : index
    %9 = vector.load %arg1[%c0_5, %c1] : memref<4x3xi32, #tpu.memory_space<vmem>>, vector<4x1xi32>
    %c0_6 = arith.constant 0 : index
    %c1_7 = arith.constant 1 : index
    %10 = vector.load %arg2[%c0_6, %c1_7] : memref<4x3xi32, #tpu.memory_space<vmem>>, vector<4x1xi32>
    %11 = vector.broadcast %9 : vector<4x1xi32> to vector<4x6000xi32>
    %12 = arith.cmpi sle, %11, %0 : vector<4x6000xi32>
    %13 = vector.broadcast %10 : vector<4x1xi32> to vector<4x6000xi32>
    %14 = arith.cmpi slt, %0, %13 : vector<4x6000xi32>
    %15 = arith.andi %12, %14 : vector<4x6000xi1>
    %16 = arith.ori %8, %15 : vector<4x6000xi1>
    %c0_8 = arith.constant 0 : index
    %c2 = arith.constant 2 : index
    %17 = vector.load %arg1[%c0_8, %c2] : memref<4x3xi32, #tpu.memory_space<vmem>>, vector<4x1xi32>
    %c0_9 = arith.constant 0 : index
    %c2_10 = arith.constant 2 : index
    %18 = vector.load %arg2[%c0_9, %c2_10] : memref<4x3xi32, #tpu.memory_space<vmem>>, vector<4x1xi32>
    %19 = vector.broadcast %17 : vector<4x1xi32> to vector<4x6000xi32>
    %20 = arith.cmpi sle, %19, %0 : vector<4x6000xi32>
    %21 = vector.broadcast %18 : vector<4x1xi32> to vector<4x6000xi32>
    %22 = arith.cmpi slt, %0, %21 : vector<4x6000xi32>
    %23 = arith.andi %20, %22 : vector<4x6000xi1>
    %24 = arith.ori %16, %23 : vector<4x6000xi1>
    %cst = arith.constant 0.000000e+00 : f32
    %25 = vector.broadcast %cst : f32 to vector<4x6000xf32>
    %26 = arith.select %24, %25, %1 : vector<4x6000xi1>, vector<4x6000xf32>
    %c0_11 = arith.constant 0 : index
    %c0_12 = arith.constant 0 : index
    %27 = vector.load %arg4[%c0_11, %c0_12] : memref<4x6000xf32, #tpu.memory_space<vmem>>, vector<4x6000xf32>
    tpu.vector_store %arg4[%c0_11, %c0_12], %26 {strides = array<i32>} : memref<4x6000xf32, #tpu.memory_space<vmem>>, vector<4x6000xf32>,
    return
  }
  func.func @transform_0(%arg0: i32) -> (i32, i32) {
    %c0_i32 = arith.constant 0 : i32
    %c0_i32_0 = arith.constant 0 : i32
    return %arg0, %c0_i32 : i32, i32
  }
  func.func @transform_1(%arg0: i32) -> (i32, i32) {
    %c0_i32 = arith.constant 0 : i32
    %c0_i32_0 = arith.constant 0 : i32
    return %arg0, %c0_i32 : i32, i32
  }
  func.func @transform_2(%arg0: i32) -> (i32, i32) {
    %c0_i32 = arith.constant 0 : i32
    %c0_i32_0 = arith.constant 0 : i32
    return %arg0, %c0_i32 : i32, i32
  }
  func.func @transform_3(%arg0: i32) -> (i32, i32) {
    %c0_i32 = arith.constant 0 : i32
    %c0_i32_0 = arith.constant 0 : i32
    return %arg0, %c0_i32 : i32, i32
  }
}

</mosaic_0001>

<llo_original>
// kernel: tpu_custom_call.1
$region0: #{tpu_custom_call.1}
  #allocation0 [shape = 'u32[]', space=smem, size = 0x4, offset = 0x4, fixed_abs, tag = 'smem constant byte address 0x4 - core index']
  #allocation1 [shape = 'u32[144,128]{1,0:T(1,128)}', space=vmem, size = 0x12000, scoped, tag = 'internal scratch']
  %s0 = inlined_call_operand.hbm [shape: s32[4,3], index: 0, kind: input, shape index: {}]
  %s1 = inlined_call_operand.hbm [shape: s32[4,3], index: 1, kind: input, shape index: {}]
  %s2 = inlined_call_operand.hbm [shape: f32[4,6000], index: 2, kind: input, shape index: {}]
  %s3 = inlined_call_operand.hbm [shape: f32[4,6000], index: 3, kind: output, shape index: {}]
  %s4 = sld [smem:[#allocation0]]
  $region34: #{tpu_custom_call.1} parent=0
    _
  %s6 = ssub.s32 1, %s4
  %s7 = scalar_select 0, %s6, %s4
  $region1: #{tpu_custom_call.1} parent=0
    #allocation2 [shape = 'u8[2048]{0}', space=vmem, size = 0x800, scoped, tag = 'input window, operand 0, single buffered']
    #allocation3 [shape = 's32[1]{0}', space=sflag, size = 0x4, scoped, tag = 'scoped memory for tpu_custom_call.1']
    #allocation4 [shape = 's32[1]{0}', space=sflag, size = 0x4, scoped, tag = 'scoped memory for tpu_custom_call.1']
    #allocation5 [shape = 'u8[2048]{0}', space=vmem, size = 0x800, scoped, tag = 'input window, operand 1, single buffered']
    #allocation6 [shape = 's32[1]{0}', space=sflag, size = 0x4, scoped, tag = 'scoped memory for tpu_custom_call.1']
    #allocation7 [shape = 'u8[96256]{0}', space=vmem, size = 0x17800, scoped, tag = 'input window, operand 2, single buffered']
    #allocation8 [shape = 'u8[96256]{0}', space=vmem, size = 0x17800, scoped, tag = 'output window, operand 0, single buffered']
    %8 = vsyncpa [#allocation3], 0
    %9 = vsyncpa [#allocation6], 0
    %10 = vsyncpa [#allocation4], 0
    // Predicated region
    $region2: #{tpu_custom_call.1} parent=1 // pred_check
      _
    $region3: #{tpu_custom_call.1} parent=1 // pred_check_branch
      %12 = sbr.rel (0) target = $region5
    $region4: #{tpu_custom_call.1} parent=1 // pred_region
      %s14 = ssub.s32 64, 64
      %15 = vsyncadd [#allocation3], %s14
      %s17 = sshll.u32 [#allocation2], 4
      %s18 = int_to_ptr.vmem [resolvable:$true] %s17
      %20 = dma.hbm_to_vmem [thread:$0]  %s0, 64, %s18, [#allocation3]
    $region5: #{tpu_custom_call.1} parent=1 // pred_fallthru
      _
    // Predicated region
    $region6: #{tpu_custom_call.1} parent=1 // pred_check
      _
    $region7: #{tpu_custom_call.1} parent=1 // pred_check_branch
      %22 = sbr.rel (0) target = $region9
    $region8: #{tpu_custom_call.1} parent=1 // pred_region
      %s24 = ssub.s32 64, 64
      %25 = vsyncadd [#allocation6], %s24
      %s27 = sshll.u32 [#allocation5], 4
      %s28 = int_to_ptr.vmem [resolvable:$true] %s27
      %30 = dma.hbm_to_vmem [thread:$0]  %s1, 64, %s28, [#allocation6]
    $region9: #{tpu_custom_call.1} parent=1 // pred_fallthru
      _
    // Predicated region
    $region10: #{tpu_custom_call.1} parent=1 // pred_check
      _
    $region11: #{tpu_custom_call.1} parent=1 // pred_check_branch
      %32 = sbr.rel (0) target = $region13
    $region12: #{tpu_custom_call.1} parent=1 // pred_region
      %s34 = ssub.s32 3008, 3008
      %35 = vsyncadd [#allocation6], %s34
      %s37 = sshll.u32 [#allocation7], 4
      %s38 = int_to_ptr.vmem [resolvable:$true] %s37
      %40 = dma.hbm_to_vmem [thread:$0]  %s2, 3008, %s38, [#allocation6]
    $region13: #{tpu_custom_call.1} parent=1 // pred_fallthru
      _
    // Predicated region
    $region14: #{tpu_custom_call.1} parent=1 // pred_check
      _
    $region15: #{tpu_custom_call.1} parent=1 // pred_check_branch
      %42 = sbr.rel (0) target = $region17
    $region16: #{tpu_custom_call.1} parent=1 // pred_region
      %43 = dma.done [#allocation3], 64
    $region17: #{tpu_custom_call.1} parent=1 // pred_fallthru
      _
    // Predicated region
    $region18: #{tpu_custom_call.1} parent=1 // pred_check
      _
    $region19: #{tpu_custom_call.1} parent=1 // pred_check_branch
      %45 = sbr.rel (0) target = $region21
    $region20: #{tpu_custom_call.1} parent=1 // pred_region
      %46 = dma.done [#allocation6], 64
    $region21: #{tpu_custom_call.1} parent=1 // pred_fallthru
      _
    // Predicated region
    $region22: #{tpu_custom_call.1} parent=1 // pred_check
      _
    $region23: #{tpu_custom_call.1} parent=1 // pred_check_branch
      %48 = sbr.rel (0) target = $region25
    $region24: #{tpu_custom_call.1} parent=1 // pred_region
      %49 = dma.done [#allocation6], 3008
    $region25: #{tpu_custom_call.1} parent=1 // pred_fallthru
      _
    %v50 = vlaneseq
    %v51 = vand.u32 %v50, 127
    %v52 = vadd.s32 %v51, 128
    %v53 = vadd.s32 %v51, 256
    %v54 = vadd.s32 %v51, 384
    %v55 = vadd.s32 %v51, 512
    %v56 = vadd.s32 %v51, 640
    %v57 = vadd.s32 %v51, 768
    %v58 = vadd.s32 %v51, 896
    %v59 = vadd.s32 %v51, 1024
    %v60 = vadd.s32 %v51, 1152
    %v61 = vadd.s32 %v51, 1280
    %v62 = vadd.s32 %v51, 1408
    %v63 = vadd.s32 %v51, 1536
    %v64 = vadd.s32 %v51, 1664
    %v65 = vadd.s32 %v51, 1792
    %v66 = vadd.s32 %v51, 1920
    %v67 = vadd.s32 %v51, 2048
    %v68 = vadd.s32 %v51, 2176
    %v69 = vadd.s32 %v51, 2304
    %v70 = vadd.s32 %v51, 2432
    %v71 = vadd.s32 %v51, 2560
    %v72 = vadd.s32 %v51, 2688
    %v73 = vadd.s32 %v51, 2816
    %v74 = vadd.s32 %v51, 2944
    %v75 = vadd.s32 %v51, 3072
    %v76 = vadd.s32 %v51, 3200
    %v77 = vadd.s32 %v51, 3328
    %v78 = vadd.s32 %v51, 3456
    %v79 = vadd.s32 %v51, 3584
    %v80 = vadd.s32 %v51, 3712
    %v81 = vadd.s32 %v51, 3840
    %v82 = vadd.s32 %v51, 3968
    %v83 = vadd.s32 %v51, 4096
    %v84 = vadd.s32 %v51, 4224
    %v85 = vadd.s32 %v51, 4352
    %v86 = vadd.s32 %v51, 4480
    %v87 = vadd.s32 %v51, 4608
    %v88 = vadd.s32 %v51, 4736
    %v89 = vadd.s32 %v51, 4864
    %v90 = vadd.s32 %v51, 4992
    %v91 = vadd.s32 %v51, 5120
    %v92 = vadd.s32 %v51, 5248
    %v93 = vadd.s32 %v51, 5376
    %v94 = vadd.s32 %v51, 5504
    %v95 = vadd.s32 %v51, 5632
    %v96 = vadd.s32 %v51, 5760
    %v97 = vadd.s32 %v51, 5888
    %v98 = vld [vmem:[#allocation7] sm:$0xff]
    %v99 = vld [vmem:[#allocation7 + $0x8] sm:$0xff]
    %v100 = vld [vmem:[#allocation7 + $0x10] sm:$0xff]
    %v101 = vld [vmem:[#allocation7 + $0x18] sm:$0xff]
    %v102 = vld [vmem:[#allocation7 + $0x20] sm:$0xff]
    %v103 = vld [vmem:[#allocation7 + $0x28] sm:$0xff]
    %v104 = vld [vmem:[#allocation7 + $0x30] sm:$0xff]
    %v105 = vld [vmem:[#allocation7 + $0x38] sm:$0xff]
    %v106 = vld [vmem:[#allocation7 + $0x40] sm:$0xff]
    %v107 = vld [vmem:[#allocation7 + $0x48] sm:$0xff]
    %v108 = vld [vmem:[#allocation7 + $0x50] sm:$0xff]
    %v109 = vld [vmem:[#allocation7 + $0x58] sm:$0xff]
    %v110 = vld [vmem:[#allocation7 + $0x60] sm:$0xff]
    %v111 = vld [vmem:[#allocation7 + $0x68] sm:$0xff]
    %v112 = vld [vmem:[#allocation7 + $0x70] sm:$0xff]
    %v113 = vld [vmem:[#allocation7 + $0x78] sm:$0xff]
    %v114 = vld [vmem:[#allocation7 + $0x80] sm:$0xff]
    %v115 = vld [vmem:[#allocation7 + $0x88] sm:$0xff]
    %v116 = vld [vmem:[#allocation7 + $0x90] sm:$0xff]
    %v117 = vld [vmem:[#allocation7 + $0x98] sm:$0xff]
    %v118 = vld [vmem:[#allocation7 + $0xa0] sm:$0xff]
    %v119 = vld [vmem:[#allocation7 + $0xa8] sm:$0xff]
    %v120 = vld [vmem:[#allocation7 + $0xb0] sm:$0xff]
    %v121 = vld [vmem:[#allocation7 + $0xb8] sm:$0xf]
    %v122 = vld [vmem:[#allocation2] sm:$0xf]
    %v123 = vld [vmem:[#allocation5] sm:$0xf]
    %124 = vset.pattern.permute.xlu0 0
    %125 = vperm.xlu0 %124, %v122
    %v126 = vpop.permute.xlu0 %125
    %vm127 = vcmp.le.s32.totalorder %v126, %v51
    %vm128 = vcmp.le.s32.totalorder %v126, %v52
    %vm129 = vcmp.le.s32.totalorder %v126, %v53
    %vm130 = vcmp.le.s32.totalorder %v126, %v54
    %vm131 = vcmp.le.s32.totalorder %v126, %v55
    %vm132 = vcmp.le.s32.totalorder %v126, %v56
    %vm133 = vcmp.le.s32.totalorder %v126, %v57
    %vm134 = vcmp.le.s32.totalorder %v126, %v58
    %vm135 = vcmp.le.s32.totalorder %v126, %v59
    %vm136 = vcmp.le.s32.totalorder %v126, %v60
    %vm137 = vcmp.le.s32.totalorder %v126, %v61
    %vm138 = vcmp.le.s32.totalorder %v126, %v62
    %vm139 = vcmp.le.s32.totalorder %v126, %v63
    %vm140 = vcmp.le.s32.totalorder %v126, %v64
    %vm141 = vcmp.le.s32.totalorder %v126, %v65
    %vm142 = vcmp.le.s32.totalorder %v126, %v66
    %vm143 = vcmp.le.s32.totalorder %v126, %v67
    %vm144 = vcmp.le.s32.totalorder %v126, %v68
    %vm145 = vcmp.le.s32.totalorder %v126, %v69
    %vm146 = vcmp.le.s32.totalorder %v126, %v70
    %vm147 = vcmp.le.s32.totalorder %v126, %v71
    %vm148 = vcmp.le.s32.totalorder %v126, %v72
    %vm149 = vcmp.le.s32.totalorder %v126, %v73
    %vm150 = vcmp.le.s32.totalorder %v126, %v74
    %vm151 = vcmp.le.s32.totalorder %v126, %v75
    %vm152 = vcmp.le.s32.totalorder %v126, %v76
    %vm153 = vcmp.le.s32.totalorder %v126, %v77
    %vm154 = vcmp.le.s32.totalorder %v126, %v78
    %vm155 = vcmp.le.s32.totalorder %v126, %v79
    %vm156 = vcmp.le.s32.totalorder %v126, %v80
    %vm157 = vcmp.le.s32.totalorder %v126, %v81
    %vm158 = vcmp.le.s32.totalorder %v126, %v82
    %vm159 = vcmp.le.s32.totalorder %v126, %v83
    %vm160 = vcmp.le.s32.totalorder %v126, %v84
    %vm161 = vcmp.le.s32.totalorder %v126, %v85
    %vm162 = vcmp.le.s32.totalorder %v126, %v86
    %vm163 = vcmp.le.s32.totalorder %v126, %v87
    %vm164 = vcmp.le.s32.totalorder %v126, %v88
    %vm165 = vcmp.le.s32.totalorder %v126, %v89
    %vm166 = vcmp.le.s32.totalorder %v126, %v90
    %vm167 = vcmp.le.s32.totalorder %v126, %v91
    %vm168 = vcmp.le.s32.totalorder %v126, %v92
    %vm169 = vcmp.le.s32.totalorder %v126, %v93
    %vm170 = vcmp.le.s32.totalorder %v126, %v94
    %vm171 = vcmp.le.s32.totalorder %v126, %v95
    %vm172 = vcmp.le.s32.totalorder %v126, %v96
    %vm173 = vcmp.le.s32.totalorder %v126, %v97
    %174 = vset.pattern.permute.xlu0 0
    %175 = vperm.xlu0 %174, %v123
    %v176 = vpop.permute.xlu0 %175
    %vm177 = vcmp.lt.s32.totalorder %v51, %v176
    %vm178 = vcmp.lt.s32.totalorder %v52, %v176
    %vm179 = vcmp.lt.s32.totalorder %v53, %v176
    %vm180 = vcmp.lt.s32.totalorder %v54, %v176
    %vm181 = vcmp.lt.s32.totalorder %v55, %v176
    %vm182 = vcmp.lt.s32.totalorder %v56, %v176
    %vm183 = vcmp.lt.s32.totalorder %v57, %v176
    %vm184 = vcmp.lt.s32.totalorder %v58, %v176
    %vm185 = vcmp.lt.s32.totalorder %v59, %v176
    %vm186 = vcmp.lt.s32.totalorder %v60, %v176
    %vm187 = vcmp.lt.s32.totalorder %v61, %v176
    %vm188 = vcmp.lt.s32.totalorder %v62, %v176
    %vm189 = vcmp.lt.s32.totalorder %v63, %v176
    %vm190 = vcmp.lt.s32.totalorder %v64, %v176
    %vm191 = vcmp.lt.s32.totalorder %v65, %v176
    %vm192 = vcmp.lt.s32.totalorder %v66, %v176
    %vm193 = vcmp.lt.s32.totalorder %v67, %v176
    %vm194 = vcmp.lt.s32.totalorder %v68, %v176
    %vm195 = vcmp.lt.s32.totalorder %v69, %v176
    %vm196 = vcmp.lt.s32.totalorder %v70, %v176
    %vm197 = vcmp.lt.s32.totalorder %v71, %v176
    %vm198 = vcmp.lt.s32.totalorder %v72, %v176
    %vm199 = vcmp.lt.s32.totalorder %v73, %v176
    %vm200 = vcmp.lt.s32.totalorder %v74, %v176
    %vm201 = vcmp.lt.s32.totalorder %v75, %v176
    %vm202 = vcmp.lt.s32.totalorder %v76, %v176
    %vm203 = vcmp.lt.s32.totalorder %v77, %v176
    %vm204 = vcmp.lt.s32.totalorder %v78, %v176
    %vm205 = vcmp.lt.s32.totalorder %v79, %v176
    %vm206 = vcmp.lt.s32.totalorder %v80, %v176
    %vm207 = vcmp.lt.s32.totalorder %v81, %v176
    %vm208 = vcmp.lt.s32.totalorder %v82, %v176
    %vm209 = vcmp.lt.s32.totalorder %v83, %v176
    %vm210 = vcmp.lt.s32.totalorder %v84, %v176
    %vm211 = vcmp.lt.s32.totalorder %v85, %v176
    %vm212 = vcmp.lt.s32.totalorder %v86, %v176
    %vm213 = vcmp.lt.s32.totalorder %v87, %v176
    %vm214 = vcmp.lt.s32.totalorder %v88, %v176
    %vm215 = vcmp.lt.s32.totalorder %v89, %v176
    %vm216 = vcmp.lt.s32.totalorder %v90, %v176
    %vm217 = vcmp.lt.s32.totalorder %v91, %v176
    %vm218 = vcmp.lt.s32.totalorder %v92, %v176
    %vm219 = vcmp.lt.s32.totalorder %v93, %v176
    %vm220 = vcmp.lt.s32.totalorder %v94, %v176
    %vm221 = vcmp.lt.s32.totalorder %v95, %v176
    %vm222 = vcmp.lt.s32.totalorder %v96, %v176
    %vm223 = vcmp.lt.s32.totalorder %v97, %v176
    %vm224 = vmand %vm127, %vm177
    %vm225 = vmand %vm128, %vm178
    %vm226 = vmand %vm129, %vm179
    %vm227 = vmand %vm130, %vm180
    %vm228 = vmand %vm131, %vm181
    %vm229 = vmand %vm132, %vm182
    %vm230 = vmand %vm133, %vm183
    %vm231 = vmand %vm134, %vm184
    %vm232 = vmand %vm135, %vm185
    %vm233 = vmand %vm136, %vm186
    %vm234 = vmand %vm137, %vm187
    %vm235 = vmand %vm138, %vm188
    %vm236 = vmand %vm139, %vm189
    %vm237 = vmand %vm140, %vm190
    %vm238 = vmand %vm141, %vm191
    %vm239 = vmand %vm142, %vm192
    %vm240 = vmand %vm143, %vm193
    %vm241 = vmand %vm144, %vm194
    %vm242 = vmand %vm145, %vm195
    %vm243 = vmand %vm146, %vm196
    %vm244 = vmand %vm147, %vm197
    %vm245 = vmand %vm148, %vm198
    %vm246 = vmand %vm149, %vm199
    %vm247 = vmand %vm150, %vm200
    %vm248 = vmand %vm151, %vm201
    %vm249 = vmand %vm152, %vm202
    %vm250 = vmand %vm153, %vm203
    %vm251 = vmand %vm154, %vm204
    %vm252 = vmand %vm155, %vm205
    %vm253 = vmand %vm156, %vm206
    %vm254 = vmand %vm157, %vm207
    %vm255 = vmand %vm158, %vm208
    %vm256 = vmand %vm159, %vm209
    %vm257 = vmand %vm160, %vm210
    %vm258 = vmand %vm161, %vm211
    %vm259 = vmand %vm162, %vm212
    %vm260 = vmand %vm163, %vm213
    %vm261 = vmand %vm164, %vm214
    %vm262 = vmand %vm165, %vm215
    %vm263 = vmand %vm166, %vm216
    %vm264 = vmand %vm167, %vm217
    %vm265 = vmand %vm168, %vm218
    %vm266 = vmand %vm169, %vm219
    %vm267 = vmand %vm170, %vm220
    %vm268 = vmand %vm171, %vm221
    %vm269 = vmand %vm172, %vm222
    %vm270 = vmand %vm173, %vm223
    %271 = vset.pattern.permute.xlu0 1
    %272 = vperm.xlu0 %271, %v122
    %v273 = vpop.permute.xlu0 %272
    %vm274 = vcmp.le.s32.totalorder %v273, %v51
    %vm275 = vcmp.le.s32.totalorder %v273, %v52
    %vm276 = vcmp.le.s32.totalorder %v273, %v53
    %vm277 = vcmp.le.s32.totalorder %v273, %v54
    %vm278 = vcmp.le.s32.totalorder %v273, %v55
    %vm279 = vcmp.le.s32.totalorder %v273, %v56
    %vm280 = vcmp.le.s32.totalorder %v273, %v57
    %vm281 = vcmp.le.s32.totalorder %v273, %v58
    %vm282 = vcmp.le.s32.totalorder %v273, %v59
    %vm283 = vcmp.le.s32.totalorder %v273, %v60
    %vm284 = vcmp.le.s32.totalorder %v273, %v61
    %vm285 = vcmp.le.s32.totalorder %v273, %v62
    %vm286 = vcmp.le.s32.totalorder %v273, %v63
    %vm287 = vcmp.le.s32.totalorder %v273, %v64
    %vm288 = vcmp.le.s32.totalorder %v273, %v65
    %vm289 = vcmp.le.s32.totalorder %v273, %v66
    %vm290 = vcmp.le.s32.totalorder %v273, %v67
    %vm291 = vcmp.le.s32.totalorder %v273, %v68
    %vm292 = vcmp.le.s32.totalorder %v273, %v69
    %vm293 = vcmp.le.s32.totalorder %v273, %v70
    %vm294 = vcmp.le.s32.totalorder %v273, %v71
    %vm295 = vcmp.le.s32.totalorder %v273, %v72
    %vm296 = vcmp.le.s32.totalorder %v273, %v73
    %vm297 = vcmp.le.s32.totalorder %v273, %v74
    %vm298 = vcmp.le.s32.totalorder %v273, %v75
    %vm299 = vcmp.le.s32.totalorder %v273, %v76
    %vm300 = vcmp.le.s32.totalorder %v273, %v77
    %vm301 = vcmp.le.s32.totalorder %v273, %v78
    %vm302 = vcmp.le.s32.totalorder %v273, %v79
    %vm303 = vcmp.le.s32.totalorder %v273, %v80
    %vm304 = vcmp.le.s32.totalorder %v273, %v81
    %vm305 = vcmp.le.s32.totalorder %v273, %v82
    %vm306 = vcmp.le.s32.totalorder %v273, %v83
    %vm307 = vcmp.le.s32.totalorder %v273, %v84
    %vm308 = vcmp.le.s32.totalorder %v273, %v85
    %vm309 = vcmp.le.s32.totalorder %v273, %v86
    %vm310 = vcmp.le.s32.totalorder %v273, %v87
    %vm311 = vcmp.le.s32.totalorder %v273, %v88
    %vm312 = vcmp.le.s32.totalorder %v273, %v89
    %vm313 = vcmp.le.s32.totalorder %v273, %v90
    %vm314 = vcmp.le.s32.totalorder %v273, %v91
    %vm315 = vcmp.le.s32.totalorder %v273, %v92
    %vm316 = vcmp.le.s32.totalorder %v273, %v93
    %vm317 = vcmp.le.s32.totalorder %v273, %v94
    %vm318 = vcmp.le.s32.totalorder %v273, %v95
    %vm319 = vcmp.le.s32.totalorder %v273, %v96
    %vm320 = vcmp.le.s32.totalorder %v273, %v97
    %321 = vset.pattern.permute.xlu0 1
    %322 = vperm.xlu0 %321, %v123
    %v323 = vpop.permute.xlu0 %322
    %vm324 = vcmp.lt.s32.totalorder %v51, %v323
    %vm325 = vcmp.lt.s32.totalorder %v52, %v323
    %vm326 = vcmp.lt.s32.totalorder %v53, %v323
    %vm327 = vcmp.lt.s32.totalorder %v54, %v323
    %vm328 = vcmp.lt.s32.totalorder %v55, %v323
    %vm329 = vcmp.lt.s32.totalorder %v56, %v323
    %vm330 = vcmp.lt.s32.totalorder %v57, %v323
    %vm331 = vcmp.lt.s32.totalorder %v58, %v323
    %vm332 = vcmp.lt.s32.totalorder %v59, %v323
    %vm333 = vcmp.lt.s32.totalorder %v60, %v323
    %vm334 = vcmp.lt.s32.totalorder %v61, %v323
    %vm335 = vcmp.lt.s32.totalorder %v62, %v323
    %vm336 = vcmp.lt.s32.totalorder %v63, %v323
    %vm337 = vcmp.lt.s32.totalorder %v64, %v323
    %vm338 = vcmp.lt.s32.totalorder %v65, %v323
    %vm339 = vcmp.lt.s32.totalorder %v66, %v323
    %vm340 = vcmp.lt.s32.totalorder %v67, %v323
    %vm341 = vcmp.lt.s32.totalorder %v68, %v323
    %vm342 = vcmp.lt.s32.totalorder %v69, %v323
    %vm343 = vcmp.lt.s32.totalorder %v70, %v323
    %vm344 = vcmp.lt.s32.totalorder %v71, %v323
    %vm345 = vcmp.lt.s32.totalorder %v72, %v323
    %vm346 = vcmp.lt.s32.totalorder %v73, %v323
    %vm347 = vcmp.lt.s32.totalorder %v74, %v323
    %vm348 = vcmp.lt.s32.totalorder %v75, %v323
    %vm349 = vcmp.lt.s32.totalorder %v76, %v323
    %vm350 = vcmp.lt.s32.totalorder %v77, %v323
    %vm351 = vcmp.lt.s32.totalorder %v78, %v323
    %vm352 = vcmp.lt.s32.totalorder %v79, %v323
    %vm353 = vcmp.lt.s32.totalorder %v80, %v323
    %vm354 = vcmp.lt.s32.totalorder %v81, %v323
    %vm355 = vcmp.lt.s32.totalorder %v82, %v323
    %vm356 = vcmp.lt.s32.totalorder %v83, %v323
    %vm357 = vcmp.lt.s32.totalorder %v84, %v323
    %vm358 = vcmp.lt.s32.totalorder %v85, %v323
    %vm359 = vcmp.lt.s32.totalorder %v86, %v323
    %vm360 = vcmp.lt.s32.totalorder %v87, %v323
    %vm361 = vcmp.lt.s32.totalorder %v88, %v323
    %vm362 = vcmp.lt.s32.totalorder %v89, %v323
    %vm363 = vcmp.lt.s32.totalorder %v90, %v323
    %vm364 = vcmp.lt.s32.totalorder %v91, %v323
    %vm365 = vcmp.lt.s32.totalorder %v92, %v323
    %vm366 = vcmp.lt.s32.totalorder %v93, %v323
    %vm367 = vcmp.lt.s32.totalorder %v94, %v323
    %vm368 = vcmp.lt.s32.totalorder %v95, %v323
    %vm369 = vcmp.lt.s32.totalorder %v96, %v323
    %vm370 = vcmp.lt.s32.totalorder %v97, %v323
    %vm371 = vmand %vm274, %vm324
    %vm372 = vmand %vm275, %vm325
    %vm373 = vmand %vm276, %vm326
    %vm374 = vmand %vm277, %vm327
    %vm375 = vmand %vm278, %vm328
    %vm376 = vmand %vm279, %vm329
    %vm377 = vmand %vm280, %vm330
    %vm378 = vmand %vm281, %vm331
    %vm379 = vmand %vm282, %vm332
    %vm380 = vmand %vm283, %vm333
    %vm381 = vmand %vm284, %vm334
    %vm382 = vmand %vm285, %vm335
    %vm383 = vmand %vm286, %vm336
    %vm384 = vmand %vm287, %vm337
    %vm385 = vmand %vm288, %vm338
    %vm386 = vmand %vm289, %vm339
    %vm387 = vmand %vm290, %vm340
    %vm388 = vmand %vm291, %vm341
    %vm389 = vmand %vm292, %vm342
    %vm390 = vmand %vm293, %vm343
    %vm391 = vmand %vm294, %vm344
    %vm392 = vmand %vm295, %vm345
    %vm393 = vmand %vm296, %vm346
    %vm394 = vmand %vm297, %vm347
    %vm395 = vmand %vm298, %vm348
    %vm396 = vmand %vm299, %vm349
    %vm397 = vmand %vm300, %vm350
    %vm398 = vmand %vm301, %vm351
    %vm399 = vmand %vm302, %vm352
    %vm400 = vmand %vm303, %vm353
    %vm401 = vmand %vm304, %vm354
    %vm402 = vmand %vm305, %vm355
    %vm403 = vmand %vm306, %vm356
    %vm404 = vmand %vm307, %vm357
    %vm405 = vmand %vm308, %vm358
    %vm406 = vmand %vm309, %vm359
    %vm407 = vmand %vm310, %vm360
    %vm408 = vmand %vm311, %vm361
    %vm409 = vmand %vm312, %vm362
    %vm410 = vmand %vm313, %vm363
    %vm411 = vmand %vm314, %vm364
    %vm412 = vmand %vm315, %vm365
    %vm413 = vmand %vm316, %vm366
    %vm414 = vmand %vm317, %vm367
    %vm415 = vmand %vm318, %vm368
    %vm416 = vmand %vm319, %vm369
    %vm417 = vmand %vm320, %vm370
    %vm418 = vmor %vm224, %vm371
    %vm419 = vmor %vm225, %vm372
    %vm420 = vmor %vm226, %vm373
    %vm421 = vmor %vm227, %vm374
    %vm422 = vmor %vm228, %vm375
    %vm423 = vmor %vm229, %vm376
    %vm424 = vmor %vm230, %vm377
    %vm425 = vmor %vm231, %vm378
    %vm426 = vmor %vm232, %vm379
    %vm427 = vmor %vm233, %vm380
    %vm428 = vmor %vm234, %vm381
    %vm429 = vmor %vm235, %vm382
    %vm430 = vmor %vm236, %vm383
    %vm431 = vmor %vm237, %vm384
    %vm432 = vmor %vm238, %vm385
    %vm433 = vmor %vm239, %vm386
    %vm434 = vmor %vm240, %vm387
    %vm435 = vmor %vm241, %vm388
    %vm436 = vmor %vm242, %vm389
    %vm437 = vmor %vm243, %vm390
    %vm438 = vmor %vm244, %vm391
    %vm439 = vmor %vm245, %vm392
    %vm440 = vmor %vm246, %vm393
    %vm441 = vmor %vm247, %vm394
    %vm442 = vmor %vm248, %vm395
    %vm443 = vmor %vm249, %vm396
    %vm444 = vmor %vm250, %vm397
    %vm445 = vmor %vm251, %vm398
    %vm446 = vmor %vm252, %vm399
    %vm447 = vmor %vm253, %vm400
    %vm448 = vmor %vm254, %vm401
    %vm449 = vmor %vm255, %vm402
    %vm450 = vmor %vm256, %vm403
    %vm451 = vmor %vm257, %vm404
    %vm452 = vmor %vm258, %vm405
    %vm453 = vmor %vm259, %vm406
    %vm454 = vmor %vm260, %vm407
    %vm455 = vmor %vm261, %vm408
    %vm456 = vmor %vm262, %vm409
    %vm457 = vmor %vm263, %vm410
    %vm458 = vmor %vm264, %vm411
    %vm459 = vmor %vm265, %vm412
    %vm460 = vmor %vm266, %vm413
    %vm461 = vmor %vm267, %vm414
    %vm462 = vmor %vm268, %vm415
    %vm463 = vmor %vm269, %vm416
    %vm464 = vmor %vm270, %vm417
    %465 = vset.pattern.permute.xlu0 2
    %466 = vperm.xlu0 %465, %v122
    %v467 = vpop.permute.xlu0 %466
    %vm468 = vcmp.le.s32.totalorder %v467, %v51
    %vm469 = vcmp.le.s32.totalorder %v467, %v52
    %vm470 = vcmp.le.s32.totalorder %v467, %v53
    %vm471 = vcmp.le.s32.totalorder %v467, %v54
    %vm472 = vcmp.le.s32.totalorder %v467, %v55
    %vm473 = vcmp.le.s32.totalorder %v467, %v56
    %vm474 = vcmp.le.s32.totalorder %v467, %v57
    %vm475 = vcmp.le.s32.totalorder %v467, %v58
    %vm476 = vcmp.le.s32.totalorder %v467, %v59
    %vm477 = vcmp.le.s32.totalorder %v467, %v60
    %vm478 = vcmp.le.s32.totalorder %v467, %v61
    %vm479 = vcmp.le.s32.totalorder %v467, %v62
    %vm480 = vcmp.le.s32.totalorder %v467, %v63
    %vm481 = vcmp.le.s32.totalorder %v467, %v64
    %vm482 = vcmp.le.s32.totalorder %v467, %v65
    %vm483 = vcmp.le.s32.totalorder %v467, %v66
    %vm484 = vcmp.le.s32.totalorder %v467, %v67
    %vm485 = vcmp.le.s32.totalorder %v467, %v68
    %vm486 = vcmp.le.s32.totalorder %v467, %v69
    %vm487 = vcmp.le.s32.totalorder %v467, %v70
    %vm488 = vcmp.le.s32.totalorder %v467, %v71
    %vm489 = vcmp.le.s32.totalorder %v467, %v72
    %vm490 = vcmp.le.s32.totalorder %v467, %v73
    %vm491 = vcmp.le.s32.totalorder %v467, %v74
    %vm492 = vcmp.le.s32.totalorder %v467, %v75
    %vm493 = vcmp.le.s32.totalorder %v467, %v76
    %vm494 = vcmp.le.s32.totalorder %v467, %v77
    %vm495 = vcmp.le.s32.totalorder %v467, %v78
    %vm496 = vcmp.le.s32.totalorder %v467, %v79
    %vm497 = vcmp.le.s32.totalorder %v467, %v80
    %vm498 = vcmp.le.s32.totalorder %v467, %v81
    %vm499 = vcmp.le.s32.totalorder %v467, %v82
    %vm500 = vcmp.le.s32.totalorder %v467, %v83
    %vm501 = vcmp.le.s32.totalorder %v467, %v84
    %vm502 = vcmp.le.s32.totalorder %v467, %v85
    %vm503 = vcmp.le.s32.totalorder %v467, %v86
    %vm504 = vcmp.le.s32.totalorder %v467, %v87
    %vm505 = vcmp.le.s32.totalorder %v467, %v88
    %vm506 = vcmp.le.s32.totalorder %v467, %v89
    %vm507 = vcmp.le.s32.totalorder %v467, %v90
    %vm508 = vcmp.le.s32.totalorder %v467, %v91
    %vm509 = vcmp.le.s32.totalorder %v467, %v92
    %vm510 = vcmp.le.s32.totalorder %v467, %v93
    %vm511 = vcmp.le.s32.totalorder %v467, %v94
    %vm512 = vcmp.le.s32.totalorder %v467, %v95
    %vm513 = vcmp.le.s32.totalorder %v467, %v96
    %vm514 = vcmp.le.s32.totalorder %v467, %v97
    %515 = vset.pattern.permute.xlu0 2
    %516 = vperm.xlu0 %515, %v123
    %v517 = vpop.permute.xlu0 %516
    %vm518 = vcmp.lt.s32.totalorder %v51, %v517
    %vm519 = vcmp.lt.s32.totalorder %v52, %v517
    %vm520 = vcmp.lt.s32.totalorder %v53, %v517
    %vm521 = vcmp.lt.s32.totalorder %v54, %v517
    %vm522 = vcmp.lt.s32.totalorder %v55, %v517
    %vm523 = vcmp.lt.s32.totalorder %v56, %v517
    %vm524 = vcmp.lt.s32.totalorder %v57, %v517
    %vm525 = vcmp.lt.s32.totalorder %v58, %v517
    %vm526 = vcmp.lt.s32.totalorder %v59, %v517
    %vm527 = vcmp.lt.s32.totalorder %v60, %v517
    %vm528 = vcmp.lt.s32.totalorder %v61, %v517
    %vm529 = vcmp.lt.s32.totalorder %v62, %v517
    %vm530 = vcmp.lt.s32.totalorder %v63, %v517
    %vm531 = vcmp.lt.s32.totalorder %v64, %v517
    %vm532 = vcmp.lt.s32.totalorder %v65, %v517
    %vm533 = vcmp.lt.s32.totalorder %v66, %v517
    %vm534 = vcmp.lt.s32.totalorder %v67, %v517
    %vm535 = vcmp.lt.s32.totalorder %v68, %v517
    %vm536 = vcmp.lt.s32.totalorder %v69, %v517
    %vm537 = vcmp.lt.s32.totalorder %v70, %v517
    %vm538 = vcmp.lt.s32.totalorder %v71, %v517
    %vm539 = vcmp.lt.s32.totalorder %v72, %v517
    %vm540 = vcmp.lt.s32.totalorder %v73, %v517
    %vm541 = vcmp.lt.s32.totalorder %v74, %v517
    %vm542 = vcmp.lt.s32.totalorder %v75, %v517
    %vm543 = vcmp.lt.s32.totalorder %v76, %v517
    %vm544 = vcmp.lt.s32.totalorder %v77, %v517
    %vm545 = vcmp.lt.s32.totalorder %v78, %v517
    %vm546 = vcmp.lt.s32.totalorder %v79, %v517
    %vm547 = vcmp.lt.s32.totalorder %v80, %v517
    %vm548 = vcmp.lt.s32.totalorder %v81, %v517
    %vm549 = vcmp.lt.s32.totalorder %v82, %v517
    %vm550 = vcmp.lt.s32.totalorder %v83, %v517
    %vm551 = vcmp.lt.s32.totalorder %v84, %v517
    %vm552 = vcmp.lt.s32.totalorder %v85, %v517
    %vm553 = vcmp.lt.s32.totalorder %v86, %v517
    %vm554 = vcmp.lt.s32.totalorder %v87, %v517
    %vm555 = vcmp.lt.s32.totalorder %v88, %v517
    %vm556 = vcmp.lt.s32.totalorder %v89, %v517
    %vm557 = vcmp.lt.s32.totalorder %v90, %v517
    %vm558 = vcmp.lt.s32.totalorder %v91, %v517
    %vm559 = vcmp.lt.s32.totalorder %v92, %v517
    %vm560 = vcmp.lt.s32.totalorder %v93, %v517
    %vm561 = vcmp.lt.s32.totalorder %v94, %v517
    %vm562 = vcmp.lt.s32.totalorder %v95, %v517
    %vm563 = vcmp.lt.s32.totalorder %v96, %v517
    %vm564 = vcmp.lt.s32.totalorder %v97, %v517
    %vm565 = vmand %vm468, %vm518
    %vm566 = vmand %vm469, %vm519
    %vm567 = vmand %vm470, %vm520
    %vm568 = vmand %vm471, %vm521
    %vm569 = vmand %vm472, %vm522
    %vm570 = vmand %vm473, %vm523
    %vm571 = vmand %vm474, %vm524
    %vm572 = vmand %vm475, %vm525
    %vm573 = vmand %vm476, %vm526
    %vm574 = vmand %vm477, %vm527
    %vm575 = vmand %vm478, %vm528
    %vm576 = vmand %vm479, %vm529
    %vm577 = vmand %vm480, %vm530
    %vm578 = vmand %vm481, %vm531
    %vm579 = vmand %vm482, %vm532
    %vm580 = vmand %vm483, %vm533
    %vm581 = vmand %vm484, %vm534
    %vm582 = vmand %vm485, %vm535
    %vm583 = vmand %vm486, %vm536
    %vm584 = vmand %vm487, %vm537
    %vm585 = vmand %vm488, %vm538
    %vm586 = vmand %vm489, %vm539
    %vm587 = vmand %vm490, %vm540
    %vm588 = vmand %vm491, %vm541
    %vm589 = vmand %vm492, %vm542
    %vm590 = vmand %vm493, %vm543
    %vm591 = vmand %vm494, %vm544
    %vm592 = vmand %vm495, %vm545
    %vm593 = vmand %vm496, %vm546
    %vm594 = vmand %vm497, %vm547
    %vm595 = vmand %vm498, %vm548
    %vm596 = vmand %vm499, %vm549
    %vm597 = vmand %vm500, %vm550
    %vm598 = vmand %vm501, %vm551
    %vm599 = vmand %vm502, %vm552
    %vm600 = vmand %vm503, %vm553
    %vm601 = vmand %vm504, %vm554
    %vm602 = vmand %vm505, %vm555
    %vm603 = vmand %vm506, %vm556
    %vm604 = vmand %vm507, %vm557
    %vm605 = vmand %vm508, %vm558
    %vm606 = vmand %vm509, %vm559
    %vm607 = vmand %vm510, %vm560
    %vm608 = vmand %vm511, %vm561
    %vm609 = vmand %vm512, %vm562
    %vm610 = vmand %vm513, %vm563
    %vm611 = vmand %vm514, %vm564
    %vm612 = vmor %vm418, %vm565
    %vm613 = vmor %vm419, %vm566
    %vm614 = vmor %vm420, %vm567
    %vm615 = vmor %vm421, %vm568
    %vm616 = vmor %vm422, %vm569
    %vm617 = vmor %vm423, %vm570
    %vm618 = vmor %vm424, %vm571
    %vm619 = vmor %vm425, %vm572
    %vm620 = vmor %vm426, %vm573
    %vm621 = vmor %vm427, %vm574
    %vm622 = vmor %vm428, %vm575
    %vm623 = vmor %vm429, %vm576
    %vm624 = vmor %vm430, %vm577
    %vm625 = vmor %vm431, %vm578
    %vm626 = vmor %vm432, %vm579
    %vm627 = vmor %vm433, %vm580
    %vm628 = vmor %vm434, %vm581
    %vm629 = vmor %vm435, %vm582
    %vm630 = vmor %vm436, %vm583
    %vm631 = vmor %vm437, %vm584
    %vm632 = vmor %vm438, %vm585
    %vm633 = vmor %vm439, %vm586
    %vm634 = vmor %vm440, %vm587
    %vm635 = vmor %vm441, %vm588
    %vm636 = vmor %vm442, %vm589
    %vm637 = vmor %vm443, %vm590
    %vm638 = vmor %vm444, %vm591
    %vm639 = vmor %vm445, %vm592
    %vm640 = vmor %vm446, %vm593
    %vm641 = vmor %vm447, %vm594
    %vm642 = vmor %vm448, %vm595
    %vm643 = vmor %vm449, %vm596
    %vm644 = vmor %vm450, %vm597
    %vm645 = vmor %vm451, %vm598
    %vm646 = vmor %vm452, %vm599
    %vm647 = vmor %vm453, %vm600
    %vm648 = vmor %vm454, %vm601
    %vm649 = vmor %vm455, %vm602
    %vm650 = vmor %vm456, %vm603
    %vm651 = vmor %vm457, %vm604
    %vm652 = vmor %vm458, %vm605
    %vm653 = vmor %vm459, %vm606
    %vm654 = vmor %vm460, %vm607
    %vm655 = vmor %vm461, %vm608
    %vm656 = vmor %vm462, %vm609
    %vm657 = vmor %vm463, %vm610
    %vm658 = vmor %vm464, %vm611
    %v682 = vcombine.high %v98, %v98
    %v683 = vcombine.high %v99, %v99
    %v684 = vcombine.high %v100, %v100
    %v685 = vcombine.high %v101, %v101
    %v686 = vcombine.high %v102, %v102
    %v687 = vcombine.high %v103, %v103
    %v688 = vcombine.high %v104, %v104
    %v689 = vcombine.high %v105, %v105
    %v690 = vcombine.high %v106, %v106
    %v691 = vcombine.high %v107, %v107
    %v692 = vcombine.high %v108, %v108
    %v693 = vcombine.high %v109, %v109
    %v694 = vcombine.high %v110, %v110
    %v695 = vcombine.high %v111, %v111
    %v696 = vcombine.high %v112, %v112
    %v697 = vcombine.high %v113, %v113
    %v698 = vcombine.high %v114, %v114
    %v699 = vcombine.high %v115, %v115
    %v700 = vcombine.high %v116, %v116
    %v701 = vcombine.high %v117, %v117
    %v702 = vcombine.high %v118, %v118
    %v703 = vcombine.high %v119, %v119
    %v704 = vcombine.high %v120, %v120
    %v728 = vsel %vm612, 0.0, %v98
    %v729 = vsel %vm613, 0.0, %v682
    %v730 = vsel %vm614, 0.0, %v99
    %v731 = vsel %vm615, 0.0, %v683
    %v732 = vsel %vm616, 0.0, %v100
    %v733 = vsel %vm617, 0.0, %v684
    %v734 = vsel %vm618, 0.0, %v101
    %v735 = vsel %vm619, 0.0, %v685
    %v736 = vsel %vm620, 0.0, %v102
    %v737 = vsel %vm621, 0.0, %v686
    %v738 = vsel %vm622, 0.0, %v103
    %v739 = vsel %vm623, 0.0, %v687
    %v740 = vsel %vm624, 0.0, %v104
    %v741 = vsel %vm625, 0.0, %v688
    %v742 = vsel %vm626, 0.0, %v105
    %v743 = vsel %vm627, 0.0, %v689
    %v744 = vsel %vm628, 0.0, %v106
    %v745 = vsel %vm629, 0.0, %v690
    %v746 = vsel %vm630, 0.0, %v107
    %v747 = vsel %vm631, 0.0, %v691
    %v748 = vsel %vm632, 0.0, %v108
    %v749 = vsel %vm633, 0.0, %v692
    %v750 = vsel %vm634, 0.0, %v109
    %v751 = vsel %vm635, 0.0, %v693
    %v752 = vsel %vm636, 0.0, %v110
    %v753 = vsel %vm637, 0.0, %v694
    %v754 = vsel %vm638, 0.0, %v111
    %v755 = vsel %vm639, 0.0, %v695
    %v756 = vsel %vm640, 0.0, %v112
    %v757 = vsel %vm641, 0.0, %v696
    %v758 = vsel %vm642, 0.0, %v113
    %v759 = vsel %vm643, 0.0, %v697
    %v760 = vsel %vm644, 0.0, %v114
    %v761 = vsel %vm645, 0.0, %v698
    %v762 = vsel %vm646, 0.0, %v115
    %v763 = vsel %vm647, 0.0, %v699
    %v764 = vsel %vm648, 0.0, %v116
    %v765 = vsel %vm649, 0.0, %v700
    %v766 = vsel %vm650, 0.0, %v117
    %v767 = vsel %vm651, 0.0, %v701
    %v768 = vsel %vm652, 0.0, %v118
    %v769 = vsel %vm653, 0.0, %v702
    %v770 = vsel %vm654, 0.0, %v119
    %v771 = vsel %vm655, 0.0, %v703
    %v772 = vsel %vm656, 0.0, %v120
    %v773 = vsel %vm657, 0.0, %v704
    %v774 = vsel %vm658, 0.0, %v121
    %v821 = vcombine.low %v728, %v729
    %v822 = vcombine.low %v730, %v731
    %v823 = vcombine.low %v732, %v733
    %v824 = vcombine.low %v734, %v735
    %v825 = vcombine.low %v736, %v737
    %v826 = vcombine.low %v738, %v739
    %v827 = vcombine.low %v740, %v741
    %v828 = vcombine.low %v742, %v743
    %v829 = vcombine.low %v744, %v745
    %v830 = vcombine.low %v746, %v747
    %v831 = vcombine.low %v748, %v749
    %v832 = vcombine.low %v750, %v751
    %v833 = vcombine.low %v752, %v753
    %v834 = vcombine.low %v754, %v755
    %v835 = vcombine.low %v756, %v757
    %v836 = vcombine.low %v758, %v759
    %v837 = vcombine.low %v760, %v761
    %v838 = vcombine.low %v762, %v763
    %v839 = vcombine.low %v764, %v765
    %v840 = vcombine.low %v766, %v767
    %v841 = vcombine.low %v768, %v769
    %v842 = vcombine.low %v770, %v771
    %v843 = vcombine.low %v772, %v773
    %867 = vst [vmem:[#allocation8] sm:$0xff] %v821
    %868 = vst [vmem:[#allocation8 + $0x8] sm:$0xff] %v822
    %869 = vst [vmem:[#allocation8 + $0x10] sm:$0xff] %v823
    %870 = vst [vmem:[#allocation8 + $0x18] sm:$0xff] %v824
    %871 = vst [vmem:[#allocation8 + $0x20] sm:$0xff] %v825
    %872 = vst [vmem:[#allocation8 + $0x28] sm:$0xff] %v826
    %873 = vst [vmem:[#allocation8 + $0x30] sm:$0xff] %v827
    %874 = vst [vmem:[#allocation8 + $0x38] sm:$0xff] %v828
    %875 = vst [vmem:[#allocation8 + $0x40] sm:$0xff] %v829
    %876 = vst [vmem:[#allocation8 + $0x48] sm:$0xff] %v830
    %877 = vst [vmem:[#allocation8 + $0x50] sm:$0xff] %v831
    %878 = vst [vmem:[#allocation8 + $0x58] sm:$0xff] %v832
    %879 = vst [vmem:[#allocation8 + $0x60] sm:$0xff] %v833
    %880 = vst [vmem:[#allocation8 + $0x68] sm:$0xff] %v834
    %881 = vst [vmem:[#allocation8 + $0x70] sm:$0xff] %v835
    %882 = vst [vmem:[#allocation8 + $0x78] sm:$0xff] %v836
    %883 = vst [vmem:[#allocation8 + $0x80] sm:$0xff] %v837
    %884 = vst [vmem:[#allocation8 + $0x88] sm:$0xff] %v838
    %885 = vst [vmem:[#allocation8 + $0x90] sm:$0xff] %v839
    %886 = vst [vmem:[#allocation8 + $0x98] sm:$0xff] %v840
    %887 = vst [vmem:[#allocation8 + $0xa0] sm:$0xff] %v841
    %888 = vst [vmem:[#allocation8 + $0xa8] sm:$0xff] %v842
    %889 = vst [vmem:[#allocation8 + $0xb0] sm:$0xff] %v843
    %vm890 = vcmask 912384
    %891 = vst.msk [vmem:[#allocation8 + $0xb8] sm:$0xf] %vm890, %v774
    // Predicated region
    $region26: #{tpu_custom_call.1} parent=1 // pred_check
      _
    $region27: #{tpu_custom_call.1} parent=1 // pred_check_branch
      %893 = sbr.rel (0) target = $region29
    $region28: #{tpu_custom_call.1} parent=1 // pred_region
      %s895 = ssub.s32 3008, 3008
      %896 = vsyncadd [#allocation4], %s895
      %s898 = sshll.u32 [#allocation8], 4
      %s899 = int_to_ptr.vmem [resolvable:$true] %s898
      %901 = dma.vmem_to_hbm [thread:$0]  %s899, 3008, %s3, [#allocation4]
    $region29: #{tpu_custom_call.1} parent=1 // pred_fallthru
      _
    // Predicated region
    $region30: #{tpu_custom_call.1} parent=1 // pred_check
      _
    $region31: #{tpu_custom_call.1} parent=1 // pred_check_branch
      %903 = sbr.rel (0) target = $region33
    $region32: #{tpu_custom_call.1} parent=1 // pred_region
      %904 = dma.done [#allocation4], 3008
    $region33: #{tpu_custom_call.1} parent=1 // pred_fallthru
      _
    %905 = vsyncpa [#allocation3], 1
    %906 = vsyncpa [#allocation6], 1
    %907 = vsyncpa [#allocation4], 1

</llo_original>
